<compile_context>
chip_gen: v7x
topology: tpu7x:2x2x1
jax: 0.10.0
libtpu: 0.0.40
codegen_flags: <defaults>
</compile_context>

<pallas_src>
import jax
import jax.numpy as jnp
from jax.experimental import pallas as pl
from jax.experimental.pallas import tpu as pltpu

GAMMA = 2          # FocalLoss(gamma=2), applied as an explicit square
NUM_CLASSES = 2    # FocalLoss(num_classes=2)
_LANES = 128


def _round_up(x: int, m: int) -> int:
    return ((x + m - 1) // m) * m


def _cdiv(a: int, b: int) -> int:
    return -(-a // b)


def _make_focal_kernel(n_valid: int, tail_mask: bool):
    """n_valid: number of real flattened elements (= 2*B).
    tail_mask: whether the last grid block contains padded / garbage data."""

    def kernel(dom_ref, x_ref, out_ref):
        # dom_ref: SMEM int32[1] = [domain]
        # x_ref:   VMEM (TR, 128) lane-dense block of the flattened logits
        # out_ref: VMEM (8, 128) per-block partial-sum tile
        d = dom_ref[0]
        x = x_ref[...].astype(jnp.float32)                 # (TR, 128)
        tr, ln = x.shape

        # Classes are interleaved along lanes: even lane = class 0, odd lane =
        # class 1 of the same sample.  Shift left by one lane so the class-1
        # logit lands on its sample's class-0 lane.  (The wrapped-in last lane
        # is an odd lane -> masked below.)
        x1 = jnp.concatenate([x[:, 1:], x[:, :1]], axis=1)

        # z = logit[domain] - logit[other]; domain outside {0, 1} is treated
        # as class 1 (the PyTorch module would mis-index instead).
        sign = jnp.where(d == 0, 1.0, -1.0).astype(jnp.float32)
        z = (x - x1) * sign                                 # valid on even lanes

        # Numerically stable 2-class focal loss (gamma = 2):
        #   e       = exp(-|z|)
        #   -log p  = softplus(-z) = max(-z, 0) + log(1 + e)
        #   1 - p   = sigmoid(-z)  = exp(-(max(z, 0) + log(1 + e)))
        e = jnp.exp(-jnp.abs(z))
        log1pe = jnp.log(1.0 + e)
        neg_log_p = jnp.maximum(-z, 0.0) + log1pe
        one_m_p = jnp.exp(-(jnp.maximum(z, 0.0) + log1pe))
        loss = (one_m_p * one_m_p) * neg_log_p

        # Keep only even (class-0) lanes: that's where each sample's loss
        # lives; odd lanes hold garbage pair-differences.
        lane = jax.lax.broadcasted_iota(jnp.int32, (tr, ln), 1)
        loss = jnp.where((lane & 1) == 0, loss, 0.0)

        def write(vals):
            # (TR,128)->(TR/8,8,128) is a free vreg re-grouping; the axis-0
            # sum is plain vreg adds and the store is one unmasked (8,128) vst.
            out_ref[...] = vals.reshape(-1, 8, _LANES).sum(axis=0)

        if tail_mask:
            i = pl.program_id(0)
            last = pl.num_programs(0) - 1

            @pl.when(i != last)
            def _():
                write(loss)

            @pl.when(i == last)
            def _():
                # Flat zero-padding and ragged-block garbage rows only ever
                # live in the last block; mask them by global element index.
                row = jax.lax.broadcasted_iota(jnp.int32, (tr, ln), 0) + i * tr
                gidx = row * ln + lane
                write(jnp.where(gidx < n_valid, loss, 0.0))
        else:
            write(loss)

    return kernel


def focal_loss(logits: jax.Array, domain, *, block_rows: int = 4096) -> jax.Array:
    """Mean 2-class focal loss (gamma=2) of `logits` (B, 2) w.r.t. `domain`."""
    B, C = logits.shape
    assert C == NUM_CLASSES == 2, "kernel is specialized for num_classes=2"
    block_rows = max(8, _round_up(block_rows, 8))

    n = 2 * B
    R = _cdiv(n, _LANES)                      # rows of the lane-dense view

    # Row-major flatten keeps the data in place; padding (one extra copy of
    # the input) only happens when B % 64 != 0.
    flat = logits.reshape(n)
    if R * _LANES != n:
        flat = jnp.pad(flat, (0, R * _LANES - n))
    x2d = flat.reshape(R, _LANES)

    # Tile rows: multiple of 8, ~2 MiB by default (block_rows=4096), but split
    # into >= 4 blocks when the input is large so both v7x TensorCores get work.
    tr = min(block_rows, _round_up(R, 8))
    quarter = _round_up(_cdiv(R, 4), 8)
    if quarter >= 512:                        # only force a split if tiles stay >= 256 KiB
        tr = min(tr, quarter)
    nb = _cdiv(R, tr)

    tail_mask = (R * _LANES != n) or (nb * tr != R)
    kernel = _make_focal_kernel(n, tail_mask)

    dom = jnp.asarray([domain], dtype=jnp.int32)

    partials = pl.pallas_call(
        kernel,
        out_shape=jax.ShapeDtypeStruct((8, _LANES * nb), jnp.float32),
        grid_spec=pltpu.PrefetchScalarGridSpec(
            num_scalar_prefetch=1,
            grid=(nb,),
            in_specs=[pl.BlockSpec((tr, _LANES), lambda i, s: (i, 0))],
            out_specs=pl.BlockSpec((8, _LANES), lambda i, s: (0, i)),
        ),
        compiler_params=pltpu.CompilerParams(
            dimension_semantics=("parallel",),     # independent batch blocks
            vmem_limit_bytes=48 * 1024 * 1024,     # safe on v7x (64 MiB physical)
        ),
    )(dom, x2d)

    # Tiny cross-block reduction + mean outside the kernel.
    return jnp.sum(partials) / jnp.float32(B)


def focal_loss_ref(logits: jax.Array, domain) -> jax.Array:
    # Pure-JAX reference mirroring the PyTorch forward.
    probs = jax.nn.softmax(logits.astype(jnp.float32), axis=1)
    label = jax.nn.one_hot(jnp.full((logits.shape[0],), domain), NUM_CLASSES,
                           dtype=jnp.float32)
    p = jnp.sum(probs * label, axis=-1)
    loss = -((1.0 - p) ** GAMMA) * jnp.log(p)
    return jnp.mean(loss)


if __name__ == "__main__":
    key = jax.random.PRNGKey(0)

    # Shape implied by the module: (B, num_classes=2) logits, scalar domain.
    B = 8
    logits = jax.random.normal(key, (B, NUM_CLASSES), dtype=jnp.float32)
    out = jax.block_until_ready(focal_loss(logits, 1))
    ref = focal_loss_ref(logits, 1)
    assert jnp.allclose(out, ref, atol=1e-5, rtol=1e-5), (out, ref)

    # Unaligned batch (flat zero-pad + ragged rows), single block.
    B2 = 300
    logits2 = jax.random.normal(jax.random.PRNGKey(1), (B2, NUM_CLASSES),
                                dtype=jnp.float32)
    out2 = jax.block_until_ready(focal_loss(logits2, 0))
    ref2 = focal_loss_ref(logits2, 0)
    assert jnp.allclose(out2, ref2, atol=1e-5, rtol=1e-5), (out2, ref2)

    # Multi-block "parallel" grid + ragged last block (tiny tiles on purpose).
    B3 = 3000
    logits3 = jax.random.normal(jax.random.PRNGKey(2), (B3, NUM_CLASSES),
                                dtype=jnp.float32)
    out3 = jax.block_until_ready(focal_loss(logits3, 1, block_rows=8))
    ref3 = focal_loss_ref(logits3, 1)
    assert jnp.allclose(out3, ref3, atol=1e-5, rtol=1e-5), (out3, ref3)

    print("KERNEL_OK")
</pallas_src>

<mosaic_0001>
module attributes {stable_mosaic.version = 11 : i64} {
  func.func @kernel(%arg0: i32, %arg1: memref<1xi32, #tpu.memory_space<smem>>, %arg2: memref<8x128xf32, #tpu.memory_space<vmem>>, %arg3: memref<8x128xf32, #tpu.memory_space<vmem>>) attributes {dimension_semantics = [#tpu.dimension_semantics<parallel>], iteration_bounds = array<i64: 1>, scalar_prefetch = 1 : i64, scratch_operands = 0 : i64, tpu.core_type = #tpu.core_type<tc>, window_params = [{transform_indices = @transform_0, window_bounds = array<i64: 8, 128>}, {transform_indices = @transform_1, window_bounds = array<i64: 8, 128>}]} {
    %c0 = arith.constant 0 : index
    %0 = memref.load %arg1[%c0] : memref<1xi32, #tpu.memory_space<smem>>
    %c0_0 = arith.constant 0 : index
    %c0_1 = arith.constant 0 : index
    %1 = vector.load %arg2[%c0_0, %c0_1] : memref<8x128xf32, #tpu.memory_space<vmem>>, vector<8x128xf32>
    %2 = vector.extract_strided_slice %1 {offsets = [0, 1], sizes = [8, 127], strides = [1, 1]} : vector<8x128xf32> to vector<8x127xf32>
    %3 = vector.extract_strided_slice %1 {offsets = [0, 0], sizes = [8, 1], strides = [1, 1]} : vector<8x128xf32> to vector<8x1xf32>
    %4 = tpu.concatenate %2, %3 in 1 : vector<8x127xf32>, vector<8x1xf32> -> vector<8x128xf32>
    %c0_i32 = arith.constant 0 : i32
    %5 = arith.cmpi eq, %0, %c0_i32 : i32
    %cst = arith.constant 1.000000e+00 : f32
    %cst_2 = arith.constant -1.000000e+00 : f32
    %6 = arith.select %5, %cst, %cst_2 : f32
    %7 = arith.subf %1, %4 : vector<8x128xf32>
    %8 = vector.broadcast %6 : f32 to vector<8x128xf32>
    %9 = arith.mulf %7, %8 : vector<8x128xf32>
    %10 = math.absf %9 : vector<8x128xf32>
    %cst_3 = arith.constant 0.000000e+00 : f32
    %11 = vector.broadcast %cst_3 : f32 to vector<8x128xf32>
    %12 = arith.subf %11, %10 : vector<8x128xf32>
    %13 = math.exp %12 : vector<8x128xf32>
    %cst_4 = arith.constant 1.000000e+00 : f32
    %14 = vector.broadcast %cst_4 : f32 to vector<8x128xf32>
    %15 = arith.addf %14, %13 : vector<8x128xf32>
    %16 = math.log %15 : vector<8x128xf32>
    %cst_5 = arith.constant 0.000000e+00 : f32
    %17 = vector.broadcast %cst_5 : f32 to vector<8x128xf32>
    %18 = arith.subf %17, %9 : vector<8x128xf32>
    %cst_6 = arith.constant 0.000000e+00 : f32
    %19 = vector.broadcast %cst_6 : f32 to vector<8x128xf32>
    %20 = arith.maximumf %18, %19 : vector<8x128xf32>
    %21 = arith.addf %20, %16 : vector<8x128xf32>
    %cst_7 = arith.constant 0.000000e+00 : f32
    %22 = vector.broadcast %cst_7 : f32 to vector<8x128xf32>
    %23 = arith.maximumf %9, %22 : vector<8x128xf32>
    %24 = arith.addf %23, %16 : vector<8x128xf32>
    %cst_8 = arith.constant 0.000000e+00 : f32
    %25 = vector.broadcast %cst_8 : f32 to vector<8x128xf32>
    %26 = arith.subf %25, %24 : vector<8x128xf32>
    %27 = math.exp %26 : vector<8x128xf32>
    %28 = arith.mulf %27, %27 : vector<8x128xf32>
    %29 = arith.mulf %28, %21 : vector<8x128xf32>
    %30 = tpu.iota {dimensions = array<i32: 1>} : vector<8x128xi32>
    %c1_i32 = arith.constant 1 : i32
    %31 = vector.broadcast %c1_i32 : i32 to vector<8x128xi32>
    %32 = arith.andi %30, %31 : vector<8x128xi32>
    %c0_i32_9 = arith.constant 0 : i32
    %33 = vector.broadcast %c0_i32_9 : i32 to vector<8x128xi32>
    %34 = arith.cmpi eq, %32, %33 : vector<8x128xi32>
    %cst_10 = arith.constant 0.000000e+00 : f32
    %35 = vector.broadcast %cst_10 : f32 to vector<8x128xf32>
    %36 = arith.select %34, %29, %35 : vector<8x128xi1>, vector<8x128xf32>
    %c0_i32_11 = arith.constant 0 : i32
    %37 = arith.cmpi ne, %arg0, %c0_i32_11 : i32
    %38 = arith.extui %37 : i1 to i32
    %c0_i32_12 = arith.constant 0 : i32
    %39 = arith.cmpi ne, %38, %c0_i32_12 : i32
    scf.if %39 {
      %43 = vector.shape_cast %36 : vector<8x128xf32> to vector<1x8x128xf32>
      %cst_15 = arith.constant dense<0.000000e+00> : vector<8x128xf32>
      %44 = vector.multi_reduction <add>, %43, %cst_15 [0] : vector<1x8x128xf32> to vector<8x128xf32>
      %c0_16 = arith.constant 0 : index
      %c0_17 = arith.constant 0 : index
      %45 = vector.load %arg3[%c0_16, %c0_17] : memref<8x128xf32, #tpu.memory_space<vmem>>, vector<8x128xf32>
      tpu.vector_store %arg3[%c0_16, %c0_17], %44 {strides = array<i32>} : memref<8x128xf32, #tpu.memory_space<vmem>>, vector<8x128xf32>,
    } else {
    }
    %c0_i32_13 = arith.constant 0 : i32
    %40 = arith.cmpi eq, %arg0, %c0_i32_13 : i32
    %41 = arith.extui %40 : i1 to i32
    %c0_i32_14 = arith.constant 0 : i32
    %42 = arith.cmpi ne, %41, %c0_i32_14 : i32
    scf.if %42 {
      %43 = tpu.iota {dimensions = array<i32: 0>} : vector<8x128xi32>
      %c8_i32 = arith.constant 8 : i32
      %44 = arith.muli %arg0, %c8_i32 : i32
      %45 = vector.broadcast %44 : i32 to vector<8x128xi32>
      %46 = arith.addi %43, %45 : vector<8x128xi32>
      %c128_i32 = arith.constant 128 : i32
      %47 = vector.broadcast %c128_i32 : i32 to vector<8x128xi32>
      %48 = arith.muli %46, %47 : vector<8x128xi32>
      %49 = arith.addi %48, %30 : vector<8x128xi32>
      %c16_i32 = arith.constant 16 : i32
      %50 = vector.broadcast %c16_i32 : i32 to vector<8x128xi32>
      %51 = arith.cmpi slt, %49, %50 : vector<8x128xi32>
      %cst_15 = arith.constant 0.000000e+00 : f32
      %52 = vector.broadcast %cst_15 : f32 to vector<8x128xf32>
      %53 = arith.select %51, %36, %52 : vector<8x128xi1>, vector<8x128xf32>
      %54 = vector.shape_cast %53 : vector<8x128xf32> to vector<1x8x128xf32>
      %cst_16 = arith.constant dense<0.000000e+00> : vector<8x128xf32>
      %55 = vector.multi_reduction <add>, %54, %cst_16 [0] : vector<1x8x128xf32> to vector<8x128xf32>
      %c0_17 = arith.constant 0 : index
      %c0_18 = arith.constant 0 : index
      %56 = vector.load %arg3[%c0_17, %c0_18] : memref<8x128xf32, #tpu.memory_space<vmem>>, vector<8x128xf32>
      tpu.vector_store %arg3[%c0_17, %c0_18], %55 {strides = array<i32>} : memref<8x128xf32, #tpu.memory_space<vmem>>, vector<8x128xf32>,
    } else {
    }
    return
  }
  func.func @transform_0(%arg0: i32, %arg1: memref<1xi32, #tpu.memory_space<smem>>) -> (i32, i32) {
    %c0_i32 = arith.constant 0 : i32
    %c0_i32_0 = arith.constant 0 : i32
    return %arg0, %c0_i32 : i32, i32
  }
  func.func @transform_1(%arg0: i32, %arg1: memref<1xi32, #tpu.memory_space<smem>>) -> (i32, i32) {
    %c0_i32 = arith.constant 0 : i32
    %c0_i32_0 = arith.constant 0 : i32
    return %c0_i32, %arg0 : i32, i32
  }
}

</mosaic_0001>

<llo_original>
// kernel: tpu_custom_call.1
$region0: #{tpu_custom_call.1}
  #allocation0 [shape = 'u32[]', space=smem, size = 0x4, offset = 0x4, fixed_abs, tag = 'smem constant byte address 0x4 - core index']
  #allocation1 [shape = 'u32[144,128]{1,0:T(1,128)}', space=vmem, size = 0x12000, scoped, tag = 'internal scratch']
  #allocation2 [shape = 's32[1]{0}', space=sflag, size = 0x4, scoped, tag = 'scoped memory for tpu_custom_call.1']
  #allocation3 [shape = 's32[1]{0:T(128)S(6)}', space=smem, size = 0x200, scoped, tag = 'prefetched SMEM operand 0']
  %s0 = inlined_call_operand.<no memory space> [shape: s32[1], index: 0, kind: input, shape index: {}]
  %s1 = inlined_call_operand.vmem [shape: f32[1,128], index: 1, kind: input, shape index: {}]
  %s2 = inlined_call_operand.hbm [shape: f32[8,128], index: 2, kind: output, shape index: {}]
  %s3 = sld [smem:[#allocation0]]
  $region22: #{tpu_custom_call.1} parent=0
    _
  %s5 = ssub.s32 1, %s3
  %s6 = scalar_select 0, %s5, %s3
  %7 = sst [smem:[#allocation3]] %s0
  $region1: #{tpu_custom_call.1} parent=0
    #allocation4 [shape = 'u8[4096]{0}', space=vmem, size = 0x1000, scoped, tag = 'output window, operand 0, single buffered']
    #allocation5 [shape = 's32[1]{0}', space=sflag, size = 0x4, scoped, tag = 'scoped memory for tpu_custom_call.1']
    %8 = vsyncpa [#allocation5], 0
    // Predicated region
    $region2: #{tpu_custom_call.1} parent=1 // pred_check
      _
    $region3: #{tpu_custom_call.1} parent=1 // pred_check_branch
      %10 = sbr.rel (0) target = $region5
    $region4: #{tpu_custom_call.1} parent=1 // pred_region
      _
    $region5: #{tpu_custom_call.1} parent=1 // pred_fallthru
      _
    %s11 = sld [smem:[#allocation3]]
    %v12 = vld [vmem:[%s1] sm:$0xff]
    %14 = vrot.lane.b32.xlu0 %v12, 127
    %v15 = vpop.permute.xlu0 %14
    %p17 = scmp.eq.s32.totalorder %s11, 0
    %s18 = scalar_select %p17, 1.0, -1.0
    %v19 = vsub.f32 %v12, %v15
    %v20 = vstv %s18
    %v21 = vmul.f32 %v19, %v20
    %v22 = vand.u32 2147483647, %v21
    %v23 = vsub.f32 0.0, %v22
    %v24 = vmul.f32 %v23, 1.442695
    %v25 = vpow.pop %v24
    %v26 = vadd.f32 %v25, 1.0
    %v27 = vlog2.pop %v26
    %v28 = vmul.f32 %v27, 0.6931472
    %v29 = vsub.f32 0.0, %v21
    %v30 = vmax.f32 %v29, 0.0
    %v31 = vadd.f32 %v30, %v28
    %v32 = vmax.f32 %v21, 0.0
    %v33 = vadd.f32 %v32, %v28
    %v34 = vsub.f32 0.0, %v33
    %v35 = vmul.f32 %v34, 1.442695
    %v36 = vpow.pop %v35
    %v37 = vmul.f32 %v36, %v36
    %v38 = vmul.f32 %v37, %v31
    %v39 = vlaneseq
    %v40 = vand.u32 %v39, 127
    %v41 = vand.u32 %v40, 1
    %vm42 = vcmp.eq.s32.totalorder %v41, 0
    %v43 = vsel %vm42, %v38, 0.0
    %p44 = scmp.ne.s32.totalorder 0, 0
    // Predicated region
    $region6: #{tpu_custom_call.1} parent=1 // pred_check
      %p45 = pneg %p44
    $region7: #{tpu_custom_call.1} parent=1 // pred_check_branch
      %47 = sbr.rel (%p45) target = $region9
    $region8: #{tpu_custom_call.1} parent=1 // pred_region
      %v48 = vadd.f32 %v43, 0.0
      %49 = vst [vmem:[#allocation4] sm:$0xff] %v48
    $region9: #{tpu_custom_call.1} parent=1 // pred_fallthru
      _
    %p50 = scmp.eq.s32.totalorder 0, 0
    // Predicated region
    $region10: #{tpu_custom_call.1} parent=1 // pred_check
      %p51 = pneg %p50
    $region11: #{tpu_custom_call.1} parent=1 // pred_check_branch
      %53 = sbr.rel (%p51) target = $region13
    $region12: #{tpu_custom_call.1} parent=1 // pred_region
      %v54 = vlaneseq
      %v55 = vshrl.u32 %v54, 7
      %s56 = smul.u32 0, 8
      %v57 = vstv %s56
      %v58 = vadd.s32 %v55, %v57
      %v59 = vmul.u32 %v58, 128
      %v60 = vadd.s32 %v59, %v40
      %vm61 = vcmp.lt.s32.totalorder %v60, 16
      %v62 = vsel %vm61, %v43, 0.0
      %v63 = vadd.f32 %v62, 0.0
      %64 = vst [vmem:[#allocation4] sm:$0xff] %v63
    $region13: #{tpu_custom_call.1} parent=1 // pred_fallthru
      _
    // Predicated region
    $region14: #{tpu_custom_call.1} parent=1 // pred_check
      _
    $region15: #{tpu_custom_call.1} parent=1 // pred_check_branch
      %66 = sbr.rel (0) target = $region17
    $region16: #{tpu_custom_call.1} parent=1 // pred_region
      %s68 = ssub.s32 128, 128
      %69 = vsyncadd [#allocation5], %s68
      %s71 = sshll.u32 [#allocation4], 4
      %s72 = int_to_ptr.vmem [resolvable:$true] %s71
      %74 = dma.vmem_to_hbm [thread:$0]  %s72, 128, %s2, [#allocation5]
    $region17: #{tpu_custom_call.1} parent=1 // pred_fallthru
      _
    // Predicated region
    $region18: #{tpu_custom_call.1} parent=1 // pred_check
      _
    $region19: #{tpu_custom_call.1} parent=1 // pred_check_branch
      %76 = sbr.rel (0) target = $region21
    $region20: #{tpu_custom_call.1} parent=1 // pred_region
      %77 = dma.done [#allocation5], 128
    $region21: #{tpu_custom_call.1} parent=1 // pred_fallthru
      _
    %78 = vsyncpa [#allocation5], 1

</llo_original>
